<compile_context>
chip_gen: v7x
topology: tpu7x:2x2x1
jax: 0.10.0
libtpu: 0.0.40
codegen_flags: <defaults>
</compile_context>

<pallas_src>
import functools

import jax
import jax.numpy as jnp
from jax import lax
from jax.experimental import pallas as pl
from jax.experimental.pallas import tpu as pltpu

EPS = 1e-5


# ----------------------------------------------------------------------------
# Shared epilogue: ReLU(y + bias) then per-branch BatchNorm (batch statistics).
# ----------------------------------------------------------------------------
def _relu_bn(y, p, num_branches, batch):
    bias = p[0:1, :]
    gamma = p[1:2, :]
    beta = p[2:3, :]
    y = jnp.maximum(y + bias, 0.0)                       # f32, VPU

    def bn_seg(seg):
        mean = jnp.mean(seg, axis=0, keepdims=True)
        c = seg - mean
        var = jnp.mean(c * c, axis=0, keepdims=True)     # biased variance
        scale = gamma * lax.rsqrt(var + EPS)             # fold gamma (EUP rsqrt)
        shift = beta - mean * scale                      # fold beta/mean
        return seg * scale + shift                       # single FMA pass

    if num_branches == 1:
        return bn_seg(y)
    parts = [bn_seg(y[br * batch:(br + 1) * batch, :]) for br in range(num_branches)]
    return jnp.concatenate(parts, axis=0)


# ----------------------------------------------------------------------------
# Fully-fused kernel: all 3 layers in one pallas_call (activations stay in VMEM).
# ----------------------------------------------------------------------------
def _fused_kernel(x_ref, w1_ref, p1_ref, w2_ref, p2_ref, w3_ref, p3_ref, o_ref,
                  *, num_branches, batch):
    h = x_ref[...]                                       # (R, CF) f32
    for w_ref, p_ref in ((w1_ref, p1_ref), (w2_ref, p2_ref), (w3_ref, p3_ref)):
        y = jnp.dot(h.astype(jnp.bfloat16), w_ref[...],
                    preferred_element_type=jnp.float32)  # bf16 MXU, f32 acc
        h = _relu_bn(y, p_ref[...], num_branches, batch)
    o_ref[...] = h


def _fused_vmem_bytes(R, CF, H):
    io = R * CF * 4 + CF * H * 2 + 2 * H * H * 2 + 3 * 3 * H * 4 + R * H * 4
    interm = 4 * R * H * 4
    return 2 * io + interm + (4 << 20)


def _fused_forward(x, params, num_branches, batch):
    R, _ = x.shape
    H = params["w1"].shape[1]
    kernel = functools.partial(_fused_kernel, num_branches=num_branches, batch=batch)
    vmem = int(min(max(_fused_vmem_bytes(R, x.shape[1], H), 16 << 20), 56 << 20))
    return pl.pallas_call(
        kernel,
        out_shape=jax.ShapeDtypeStruct((R, H), jnp.float32),
        compiler_params=pltpu.CompilerParams(vmem_limit_bytes=vmem),
    )(x, params["w1"], params["p1"],
      params["w2"], params["p2"],
      params["w3"], params["p3"])


# ----------------------------------------------------------------------------
# Fallback: one Linear -> ReLU -> BN layer, tiled over the output-feature axis.
# ----------------------------------------------------------------------------
def _layer_kernel(x_ref, w_ref, p_ref, o_ref, *, num_branches, batch):
    y = jnp.dot(x_ref[...].astype(jnp.bfloat16), w_ref[...],
                preferred_element_type=jnp.float32)
    o_ref[...] = _relu_bn(y, p_ref[...], num_branches, batch)


def _pick_tile_n(h, max_tile=512):
    """Largest multiple-of-128 divisor of h that is <= max_tile (else full h)."""
    if h <= max_tile:
        return h
    t = (max_tile // 128) * 128
    while t >= 128:
        if h % t == 0:
            return t
        t -= 128
    return h


def _linear_relu_bn_layer(x, w_bf16, p, *, num_branches, batch):
    R, K = x.shape
    H = w_bf16.shape[1]
    tn = _pick_tile_n(H)
    grid = (H // tn,)

    kernel = functools.partial(_layer_kernel, num_branches=num_branches, batch=batch)

    vmem_bytes = 2 * (R * K * 4 + K * tn * 2 + 8 * tn * 4 + R * tn * 4) + (4 << 20)
    vmem_bytes = int(min(max(vmem_bytes, 32 << 20), 56 << 20))

    return pl.pallas_call(
        kernel,
        out_shape=jax.ShapeDtypeStruct((R, H), jnp.float32),
        grid_spec=pltpu.PrefetchScalarGridSpec(
            num_scalar_prefetch=0,
            grid=grid,
            in_specs=[
                pl.BlockSpec((R, K), lambda n: (0, 0)),    # activations, resident
                pl.BlockSpec((K, tn), lambda n: (0, n)),   # weight column tile
                pl.BlockSpec((3, tn), lambda n: (0, n)),   # [bias; gamma; beta]
            ],
            out_specs=pl.BlockSpec((R, tn), lambda n: (0, n)),
        ),
        compiler_params=pltpu.CompilerParams(
            dimension_semantics=("parallel",),   # BN is per-feature -> N tiles independent
            vmem_limit_bytes=vmem_bytes,
        ),
    )(x, w_bf16, p)


def _per_layer_forward(x, params, num_branches, batch):
    h = x
    for i in (1, 2, 3):
        h = _linear_relu_bn_layer(
            h, params[f"w{i}"], params[f"p{i}"], num_branches=num_branches, batch=batch)
    return h


# ----------------------------------------------------------------------------
# Public wrappers
# ----------------------------------------------------------------------------
def _forward_impl(x, params, num_branches, batch):
    R, CF = x.shape
    H = params["w1"].shape[1]
    if _fused_vmem_bytes(R, CF, H) <= (40 << 20):
        return _fused_forward(x, params, num_branches, batch)
    return _per_layer_forward(x, params, num_branches, batch)


def siamese_forward(x, params):
    """forward(x) of the PyTorch module: (B, cf_size) f32 -> (B, 2*cf_size) f32."""
    return _forward_impl(x, params, num_branches=1, batch=x.shape[0])


def siamese_triplet_forward(x_anchor, x_pos, x_neg, params):
    """Fused triplet forward: shared weights, BN stats computed per branch."""
    B = x_anchor.shape[0]
    h = jnp.concatenate([x_anchor, x_pos, x_neg], axis=0)   # (3B, CF)
    out = _forward_impl(h, params, num_branches=3, batch=B)
    return out[:B], out[B:2 * B], out[2 * B:]


# ----------------------------------------------------------------------------
# Parameter init (matches the PyTorch module's init)
# ----------------------------------------------------------------------------
def init_params(key, cf_size):
    h = 2 * cf_size
    k1, k2, k3 = jax.random.split(key, 3)

    def layer_w(k, fan_in, fan_out):
        # torch.nn.init.xavier_uniform_ on (out, in), transposed to (in, out)
        # for h @ W, pre-cast to bf16 for the MXU.
        bound = (6.0 / (fan_in + fan_out)) ** 0.5
        w = jax.random.uniform(k, (fan_out, fan_in), jnp.float32, -bound, bound)
        return w.T.astype(jnp.bfloat16)

    bias = jnp.full((h,), 0.01, jnp.float32)   # layer.bias.data.fill_(0.01)
    gamma = jnp.ones((h,), jnp.float32)        # BatchNorm1d default affine
    beta = jnp.zeros((h,), jnp.float32)
    packed = jnp.stack([bias, gamma, beta], axis=0)   # (3, h)

    return dict(
        w1=layer_w(k1, cf_size, h), p1=packed,
        w2=layer_w(k2, h, h),       p2=packed,
        w3=layer_w(k3, h, h),       p3=packed,
    )


# ----------------------------------------------------------------------------
# Pure-JAX references
# ----------------------------------------------------------------------------
def _reference(x, params, num_branches, batch, bf16_matmul):
    def blk(hh, w, p):
        if bf16_matmul:
            y = jnp.dot(hh.astype(jnp.bfloat16), w,
                        preferred_element_type=jnp.float32)
        else:
            y = jnp.dot(hh, w.astype(jnp.float32),
                        preferred_element_type=jnp.float32)
        y = jnp.maximum(y + p[0:1], 0.0)
        outs = []
        for br in range(num_branches):
            seg = y[br * batch:(br + 1) * batch]
            m = jnp.mean(seg, axis=0, keepdims=True)
            v = jnp.mean((seg - m) ** 2, axis=0, keepdims=True)
            scale = p[1:2] * lax.rsqrt(v + EPS)
            shift = p[2:3] - m * scale
            outs.append(seg * scale + shift)
        return jnp.concatenate(outs, axis=0)

    h = blk(x, params["w1"], params["p1"])
    h = blk(h, params["w2"], params["p2"])
    h = blk(h, params["w3"], params["p3"])
    return h


# ----------------------------------------------------------------------------
if __name__ == "__main__":
    B, CF = 16, 64            # hidden = 2*CF = 128 -> lane-dense output
    H = 2 * CF
    key = jax.random.PRNGKey(0)
    kxa, kxp, kxn, kp = jax.random.split(key, 4)
    xa = jax.random.normal(kxa, (B, CF), jnp.float32)
    xp_ = jax.random.normal(kxp, (B, CF), jnp.float32)
    xn = jax.random.normal(kxn, (B, CF), jnp.float32)
    params = init_params(kp, CF)

    # --- forward(x) of the spec module (single branch) ---------------------
    fo = jax.block_until_ready(siamese_forward(xa, params))
    assert fo.shape == (B, H)
    ref_once_bf16 = _reference(xa, params, 1, B, bf16_matmul=True)
    assert jnp.allclose(fo, ref_once_bf16, atol=1e-3, rtol=1e-3)
    ref_once_f32 = _reference(xa, params, 1, B, bf16_matmul=False)
    assert jnp.allclose(fo, ref_once_f32, atol=2e-1, rtol=1e-1)

    # --- fused triplet helper (three independent forward() calls) ----------
    fa, fp, fn = jax.block_until_ready(siamese_triplet_forward(xa, xp_, xn, params))
    out = jnp.concatenate([fa, fp, fn], axis=0)
    assert out.shape == (3 * B, H)
    xcat = jnp.concatenate([xa, xp_, xn], axis=0)
    ref_tri_bf16 = _reference(xcat, params, 3, B, bf16_matmul=True)
    assert jnp.allclose(out, ref_tri_bf16, atol=1e-3, rtol=1e-3)

    # --- also exercise the per-layer tiled fallback path --------------------
    fo_tiled = jax.block_until_ready(
        _per_layer_forward(xa, params, num_branches=1, batch=B))
    assert jnp.allclose(fo_tiled, ref_once_bf16, atol=1e-3, rtol=1e-3)

    print("KERNEL_OK")
</pallas_src>

<mosaic_0001>
module attributes {stable_mosaic.version = 11 : i64} {
  func.func @_fused_kernel(%arg0: memref<16x64xf32, #tpu.memory_space<vmem>>, %arg1: memref<64x128xbf16, #tpu.memory_space<vmem>>, %arg2: memref<3x128xf32, #tpu.memory_space<vmem>>, %arg3: memref<128x128xbf16, #tpu.memory_space<vmem>>, %arg4: memref<3x128xf32, #tpu.memory_space<vmem>>, %arg5: memref<128x128xbf16, #tpu.memory_space<vmem>>, %arg6: memref<3x128xf32, #tpu.memory_space<vmem>>, %arg7: memref<16x128xf32, #tpu.memory_space<vmem>>) attributes {dimension_semantics = [], scalar_prefetch = 0 : i64, scratch_operands = 0 : i64, tpu.core_type = #tpu.core_type<tc>} {
    %c0 = arith.constant 0 : index
    %c0_0 = arith.constant 0 : index
    %0 = vector.load %arg0[%c0, %c0_0] : memref<16x64xf32, #tpu.memory_space<vmem>>, vector<16x64xf32>
    %1 = arith.truncf %0 : vector<16x64xf32> to vector<16x64xbf16>
    %c0_1 = arith.constant 0 : index
    %c0_2 = arith.constant 0 : index
    %2 = vector.load %arg1[%c0_1, %c0_2] : memref<64x128xbf16, #tpu.memory_space<vmem>>, vector<64x128xbf16>
    %cst = arith.constant dense<0.000000e+00> : vector<16x128xf32>
    %3 = tpu.matmul %1, %2, %cst {dimension_numbers = #tpu.dot_dimension_numbers<[1], [0], [0], [1], [0, 0, 1, 1], [], []>} : vector<16x64xbf16>, vector<64x128xbf16>, vector<16x128xf32> -> vector<16x128xf32>
    %c0_3 = arith.constant 0 : index
    %c0_4 = arith.constant 0 : index
    %4 = vector.load %arg2[%c0_3, %c0_4] : memref<3x128xf32, #tpu.memory_space<vmem>>, vector<3x128xf32>
    %5 = vector.extract_strided_slice %4 {offsets = [0, 0], sizes = [1, 128], strides = [1, 1]} : vector<3x128xf32> to vector<1x128xf32>
    %6 = vector.extract_strided_slice %4 {offsets = [1, 0], sizes = [1, 128], strides = [1, 1]} : vector<3x128xf32> to vector<1x128xf32>
    %7 = vector.extract_strided_slice %4 {offsets = [2, 0], sizes = [1, 128], strides = [1, 1]} : vector<3x128xf32> to vector<1x128xf32>
    %8 = vector.broadcast %5 : vector<1x128xf32> to vector<16x128xf32>
    %9 = arith.addf %3, %8 : vector<16x128xf32>
    %cst_5 = arith.constant 0.000000e+00 : f32
    %10 = vector.broadcast %cst_5 : f32 to vector<16x128xf32>
    %11 = arith.maximumf %9, %10 : vector<16x128xf32>
    %cst_6 = arith.constant dense<0.000000e+00> : vector<128xf32>
    %12 = vector.multi_reduction <add>, %11, %cst_6 [0] : vector<16x128xf32> to vector<128xf32>
    %13 = vector.shape_cast %12 : vector<128xf32> to vector<1x128xf32>
    %cst_7 = arith.constant 1.600000e+01 : f32
    %14 = vector.broadcast %cst_7 : f32 to vector<1x128xf32>
    %15 = arith.divf %13, %14 : vector<1x128xf32>
    %16 = vector.broadcast %15 : vector<1x128xf32> to vector<16x128xf32>
    %17 = arith.subf %11, %16 : vector<16x128xf32>
    %18 = arith.mulf %17, %17 : vector<16x128xf32>
    %cst_8 = arith.constant dense<0.000000e+00> : vector<128xf32>
    %19 = vector.multi_reduction <add>, %18, %cst_8 [0] : vector<16x128xf32> to vector<128xf32>
    %20 = vector.shape_cast %19 : vector<128xf32> to vector<1x128xf32>
    %cst_9 = arith.constant 1.600000e+01 : f32
    %21 = vector.broadcast %cst_9 : f32 to vector<1x128xf32>
    %22 = arith.divf %20, %21 : vector<1x128xf32>
    %cst_10 = arith.constant 9.99999974E-6 : f32
    %23 = vector.broadcast %cst_10 : f32 to vector<1x128xf32>
    %24 = arith.addf %22, %23 : vector<1x128xf32>
    %25 = math.rsqrt %24 : vector<1x128xf32>
    %26 = arith.mulf %6, %25 : vector<1x128xf32>
    %27 = arith.mulf %15, %26 : vector<1x128xf32>
    %28 = arith.subf %7, %27 : vector<1x128xf32>
    %29 = vector.broadcast %26 : vector<1x128xf32> to vector<16x128xf32>
    %30 = arith.mulf %11, %29 : vector<16x128xf32>
    %31 = vector.broadcast %28 : vector<1x128xf32> to vector<16x128xf32>
    %32 = arith.addf %30, %31 : vector<16x128xf32>
    %33 = arith.truncf %32 : vector<16x128xf32> to vector<16x128xbf16>
    %c0_11 = arith.constant 0 : index
    %c0_12 = arith.constant 0 : index
    %34 = vector.load %arg3[%c0_11, %c0_12] : memref<128x128xbf16, #tpu.memory_space<vmem>>, vector<128x128xbf16>
    %cst_13 = arith.constant dense<0.000000e+00> : vector<16x128xf32>
    %35 = tpu.matmul %33, %34, %cst_13 {dimension_numbers = #tpu.dot_dimension_numbers<[1], [0], [0], [1], [0, 0, 1, 1], [], []>} : vector<16x128xbf16>, vector<128x128xbf16>, vector<16x128xf32> -> vector<16x128xf32>
    %c0_14 = arith.constant 0 : index
    %c0_15 = arith.constant 0 : index
    %36 = vector.load %arg4[%c0_14, %c0_15] : memref<3x128xf32, #tpu.memory_space<vmem>>, vector<3x128xf32>
    %37 = vector.extract_strided_slice %36 {offsets = [0, 0], sizes = [1, 128], strides = [1, 1]} : vector<3x128xf32> to vector<1x128xf32>
    %38 = vector.extract_strided_slice %36 {offsets = [1, 0], sizes = [1, 128], strides = [1, 1]} : vector<3x128xf32> to vector<1x128xf32>
    %39 = vector.extract_strided_slice %36 {offsets = [2, 0], sizes = [1, 128], strides = [1, 1]} : vector<3x128xf32> to vector<1x128xf32>
    %40 = vector.broadcast %37 : vector<1x128xf32> to vector<16x128xf32>
    %41 = arith.addf %35, %40 : vector<16x128xf32>
    %cst_16 = arith.constant 0.000000e+00 : f32
    %42 = vector.broadcast %cst_16 : f32 to vector<16x128xf32>
    %43 = arith.maximumf %41, %42 : vector<16x128xf32>
    %cst_17 = arith.constant dense<0.000000e+00> : vector<128xf32>
    %44 = vector.multi_reduction <add>, %43, %cst_17 [0] : vector<16x128xf32> to vector<128xf32>
    %45 = vector.shape_cast %44 : vector<128xf32> to vector<1x128xf32>
    %cst_18 = arith.constant 1.600000e+01 : f32
    %46 = vector.broadcast %cst_18 : f32 to vector<1x128xf32>
    %47 = arith.divf %45, %46 : vector<1x128xf32>
    %48 = vector.broadcast %47 : vector<1x128xf32> to vector<16x128xf32>
    %49 = arith.subf %43, %48 : vector<16x128xf32>
    %50 = arith.mulf %49, %49 : vector<16x128xf32>
    %cst_19 = arith.constant dense<0.000000e+00> : vector<128xf32>
    %51 = vector.multi_reduction <add>, %50, %cst_19 [0] : vector<16x128xf32> to vector<128xf32>
    %52 = vector.shape_cast %51 : vector<128xf32> to vector<1x128xf32>
    %cst_20 = arith.constant 1.600000e+01 : f32
    %53 = vector.broadcast %cst_20 : f32 to vector<1x128xf32>
    %54 = arith.divf %52, %53 : vector<1x128xf32>
    %cst_21 = arith.constant 9.99999974E-6 : f32
    %55 = vector.broadcast %cst_21 : f32 to vector<1x128xf32>
    %56 = arith.addf %54, %55 : vector<1x128xf32>
    %57 = math.rsqrt %56 : vector<1x128xf32>
    %58 = arith.mulf %38, %57 : vector<1x128xf32>
    %59 = arith.mulf %47, %58 : vector<1x128xf32>
    %60 = arith.subf %39, %59 : vector<1x128xf32>
    %61 = vector.broadcast %58 : vector<1x128xf32> to vector<16x128xf32>
    %62 = arith.mulf %43, %61 : vector<16x128xf32>
    %63 = vector.broadcast %60 : vector<1x128xf32> to vector<16x128xf32>
    %64 = arith.addf %62, %63 : vector<16x128xf32>
    %65 = arith.truncf %64 : vector<16x128xf32> to vector<16x128xbf16>
    %c0_22 = arith.constant 0 : index
    %c0_23 = arith.constant 0 : index
    %66 = vector.load %arg5[%c0_22, %c0_23] : memref<128x128xbf16, #tpu.memory_space<vmem>>, vector<128x128xbf16>
    %cst_24 = arith.constant dense<0.000000e+00> : vector<16x128xf32>
    %67 = tpu.matmul %65, %66, %cst_24 {dimension_numbers = #tpu.dot_dimension_numbers<[1], [0], [0], [1], [0, 0, 1, 1], [], []>} : vector<16x128xbf16>, vector<128x128xbf16>, vector<16x128xf32> -> vector<16x128xf32>
    %c0_25 = arith.constant 0 : index
    %c0_26 = arith.constant 0 : index
    %68 = vector.load %arg6[%c0_25, %c0_26] : memref<3x128xf32, #tpu.memory_space<vmem>>, vector<3x128xf32>
    %69 = vector.extract_strided_slice %68 {offsets = [0, 0], sizes = [1, 128], strides = [1, 1]} : vector<3x128xf32> to vector<1x128xf32>
    %70 = vector.extract_strided_slice %68 {offsets = [1, 0], sizes = [1, 128], strides = [1, 1]} : vector<3x128xf32> to vector<1x128xf32>
    %71 = vector.extract_strided_slice %68 {offsets = [2, 0], sizes = [1, 128], strides = [1, 1]} : vector<3x128xf32> to vector<1x128xf32>
    %72 = vector.broadcast %69 : vector<1x128xf32> to vector<16x128xf32>
    %73 = arith.addf %67, %72 : vector<16x128xf32>
    %cst_27 = arith.constant 0.000000e+00 : f32
    %74 = vector.broadcast %cst_27 : f32 to vector<16x128xf32>
    %75 = arith.maximumf %73, %74 : vector<16x128xf32>
    %cst_28 = arith.constant dense<0.000000e+00> : vector<128xf32>
    %76 = vector.multi_reduction <add>, %75, %cst_28 [0] : vector<16x128xf32> to vector<128xf32>
    %77 = vector.shape_cast %76 : vector<128xf32> to vector<1x128xf32>
    %cst_29 = arith.constant 1.600000e+01 : f32
    %78 = vector.broadcast %cst_29 : f32 to vector<1x128xf32>
    %79 = arith.divf %77, %78 : vector<1x128xf32>
    %80 = vector.broadcast %79 : vector<1x128xf32> to vector<16x128xf32>
    %81 = arith.subf %75, %80 : vector<16x128xf32>
    %82 = arith.mulf %81, %81 : vector<16x128xf32>
    %cst_30 = arith.constant dense<0.000000e+00> : vector<128xf32>
    %83 = vector.multi_reduction <add>, %82, %cst_30 [0] : vector<16x128xf32> to vector<128xf32>
    %84 = vector.shape_cast %83 : vector<128xf32> to vector<1x128xf32>
    %cst_31 = arith.constant 1.600000e+01 : f32
    %85 = vector.broadcast %cst_31 : f32 to vector<1x128xf32>
    %86 = arith.divf %84, %85 : vector<1x128xf32>
    %cst_32 = arith.constant 9.99999974E-6 : f32
    %87 = vector.broadcast %cst_32 : f32 to vector<1x128xf32>
    %88 = arith.addf %86, %87 : vector<1x128xf32>
    %89 = math.rsqrt %88 : vector<1x128xf32>
    %90 = arith.mulf %70, %89 : vector<1x128xf32>
    %91 = arith.mulf %79, %90 : vector<1x128xf32>
    %92 = arith.subf %71, %91 : vector<1x128xf32>
    %93 = vector.broadcast %90 : vector<1x128xf32> to vector<16x128xf32>
    %94 = arith.mulf %75, %93 : vector<16x128xf32>
    %95 = vector.broadcast %92 : vector<1x128xf32> to vector<16x128xf32>
    %96 = arith.addf %94, %95 : vector<16x128xf32>
    %c0_33 = arith.constant 0 : index
    %c0_34 = arith.constant 0 : index
    %97 = vector.load %arg7[%c0_33, %c0_34] : memref<16x128xf32, #tpu.memory_space<vmem>>, vector<16x128xf32>
    tpu.vector_store %arg7[%c0_33, %c0_34], %96 {strides = array<i32>} : memref<16x128xf32, #tpu.memory_space<vmem>>, vector<16x128xf32>,
    return
  }
}

</mosaic_0001>

<llo_original>
// kernel: tpu_custom_call.1
$region0: #{tpu_custom_call.1}
  #allocation0 [shape = 'u32[]', space=smem, size = 0x4, offset = 0x4, fixed_abs, tag = 'smem constant byte address 0x4 - core index']
  #allocation1 [shape = 'u32[144,128]{1,0:T(1,128)}', space=vmem, size = 0x12000, scoped, tag = 'internal scratch']
  %s0 = inlined_call_operand.hbm [shape: f32[16,64], index: 0, kind: input, shape index: {}]
  %s1 = inlined_call_operand.hbm [shape: bf16[64,128], index: 1, kind: input, shape index: {}]
  %s2 = inlined_call_operand.vmem [shape: f32[3,128], index: 2, kind: input, shape index: {}]
  %s3 = inlined_call_operand.hbm [shape: bf16[128,128], index: 3, kind: input, shape index: {}]
  %s4 = inlined_call_operand.vmem [shape: f32[3,128], index: 4, kind: input, shape index: {}]
  %s5 = inlined_call_operand.hbm [shape: bf16[128,128], index: 5, kind: input, shape index: {}]
  %s6 = inlined_call_operand.vmem [shape: f32[3,128], index: 6, kind: input, shape index: {}]
  %s7 = inlined_call_operand.hbm [shape: f32[16,128], index: 7, kind: output, shape index: {}]
  %s8 = sld [smem:[#allocation0]]
  $region54: #{tpu_custom_call.1} parent=0
    _
  %s10 = ssub.s32 1, %s8
  %s11 = scalar_select 0, %s10, %s8
  $region1: #{tpu_custom_call.1} parent=0
    #allocation2 [shape = 'u8[8192]{0}', space=vmem, size = 0x2000, scoped, tag = 'input window, operand 0, single buffered']
    #allocation3 [shape = 's32[1]{0}', space=sflag, size = 0x4, scoped, tag = 'scoped memory for tpu_custom_call.1']
    #allocation4 [shape = 's32[1]{0}', space=sflag, size = 0x4, scoped, tag = 'scoped memory for tpu_custom_call.1']
    #allocation5 [shape = 'u8[16384]{0}', space=vmem, size = 0x4000, scoped, tag = 'input window, operand 1, single buffered']
    #allocation6 [shape = 's32[1]{0}', space=sflag, size = 0x4, scoped, tag = 'scoped memory for tpu_custom_call.1']
    #allocation7 [shape = 'u8[32768]{0}', space=vmem, size = 0x8000, scoped, tag = 'input window, operand 3, single buffered']
    #allocation8 [shape = 'u8[32768]{0}', space=vmem, size = 0x8000, scoped, tag = 'input window, operand 5, single buffered']
    #allocation9 [shape = 's32[1]{0}', space=sflag, size = 0x4, scoped, tag = 'scoped memory for tpu_custom_call.1']
    #allocation10 [shape = 'u8[8192]{0}', space=vmem, size = 0x2000, scoped, tag = 'output window, operand 0, single buffered']
    %12 = vsyncpa [#allocation3], 0
    %13 = vsyncpa [#allocation6], 0
    %14 = vsyncpa [#allocation9], 0
    %15 = vsyncpa [#allocation4], 0
    // Predicated region
    $region2: #{tpu_custom_call.1} parent=1 // pred_check
      _
    $region3: #{tpu_custom_call.1} parent=1 // pred_check_branch
      %17 = sbr.rel (0) target = $region5
    $region4: #{tpu_custom_call.1} parent=1 // pred_region
      %s19 = ssub.s32 256, 256
      %20 = vsyncadd [#allocation3], %s19
      %s21 = sshll.u32 [#allocation2], 4
      %s22 = int_to_ptr.vmem [resolvable:$true] %s21
      %27 = dma.hbm_to_vmem [thread:$0]  %s0, 256, %s22, [#allocation3], 128, 128, 8
    $region5: #{tpu_custom_call.1} parent=1 // pred_fallthru
      _
    // Predicated region
    $region6: #{tpu_custom_call.1} parent=1 // pred_check
      _
    $region7: #{tpu_custom_call.1} parent=1 // pred_check_branch
      %29 = sbr.rel (0) target = $region9
    $region8: #{tpu_custom_call.1} parent=1 // pred_region
      %s31 = ssub.s32 512, 512
      %32 = vsyncadd [#allocation6], %s31
      %s33 = sshll.u32 [#allocation5], 4
      %s34 = int_to_ptr.vmem [resolvable:$true] %s33
      %39 = dma.hbm_to_vmem [thread:$0]  %s1, 512, %s34, [#allocation6], 64, 64, 4
    $region9: #{tpu_custom_call.1} parent=1 // pred_fallthru
      _
    // Predicated region
    $region10: #{tpu_custom_call.1} parent=1 // pred_check
      _
    $region11: #{tpu_custom_call.1} parent=1 // pred_check_branch
      %41 = sbr.rel (0) target = $region13
    $region12: #{tpu_custom_call.1} parent=1 // pred_region
      _
    $region13: #{tpu_custom_call.1} parent=1 // pred_fallthru
      _
    // Predicated region
    $region14: #{tpu_custom_call.1} parent=1 // pred_check
      _
    $region15: #{tpu_custom_call.1} parent=1 // pred_check_branch
      %43 = sbr.rel (0) target = $region17
    $region16: #{tpu_custom_call.1} parent=1 // pred_region
      %s45 = ssub.s32 1024, 1024
      %46 = vsyncadd [#allocation6], %s45
      %s47 = sshll.u32 [#allocation7], 4
      %s48 = int_to_ptr.vmem [resolvable:$true] %s47
      %53 = dma.hbm_to_vmem [thread:$0]  %s3, 1024, %s48, [#allocation6], 64, 64, 4
    $region17: #{tpu_custom_call.1} parent=1 // pred_fallthru
      _
    // Predicated region
    $region18: #{tpu_custom_call.1} parent=1 // pred_check
      _
    $region19: #{tpu_custom_call.1} parent=1 // pred_check_branch
      %55 = sbr.rel (0) target = $region21
    $region20: #{tpu_custom_call.1} parent=1 // pred_region
      _
    $region21: #{tpu_custom_call.1} parent=1 // pred_fallthru
      _
    // Predicated region
    $region22: #{tpu_custom_call.1} parent=1 // pred_check
      _
    $region23: #{tpu_custom_call.1} parent=1 // pred_check_branch
      %57 = sbr.rel (0) target = $region25
    $region24: #{tpu_custom_call.1} parent=1 // pred_region
      %s59 = ssub.s32 1024, 1024
      %60 = vsyncadd [#allocation9], %s59
      %s61 = sshll.u32 [#allocation8], 4
      %s62 = int_to_ptr.vmem [resolvable:$true] %s61
      %67 = dma.hbm_to_vmem [thread:$0]  %s5, 1024, %s62, [#allocation9], 64, 64, 4
    $region25: #{tpu_custom_call.1} parent=1 // pred_fallthru
      _
    // Predicated region
    $region26: #{tpu_custom_call.1} parent=1 // pred_check
      _
    $region27: #{tpu_custom_call.1} parent=1 // pred_check_branch
      %69 = sbr.rel (0) target = $region29
    $region28: #{tpu_custom_call.1} parent=1 // pred_region
      _
    $region29: #{tpu_custom_call.1} parent=1 // pred_fallthru
      _
    // Predicated region
    $region30: #{tpu_custom_call.1} parent=1 // pred_check
      _
    $region31: #{tpu_custom_call.1} parent=1 // pred_check_branch
      %71 = sbr.rel (0) target = $region33
    $region32: #{tpu_custom_call.1} parent=1 // pred_region
      %72 = dma.done [#allocation3], 256
    $region33: #{tpu_custom_call.1} parent=1 // pred_fallthru
      _
    // Predicated region
    $region34: #{tpu_custom_call.1} parent=1 // pred_check
      _
    $region35: #{tpu_custom_call.1} parent=1 // pred_check_branch
      %74 = sbr.rel (0) target = $region37
    $region36: #{tpu_custom_call.1} parent=1 // pred_region
      %75 = dma.done [#allocation6], 512
    $region37: #{tpu_custom_call.1} parent=1 // pred_fallthru
      _
    // Predicated region
    $region38: #{tpu_custom_call.1} parent=1 // pred_check
      _
    $region39: #{tpu_custom_call.1} parent=1 // pred_check_branch
      %77 = sbr.rel (0) target = $region41
    $region40: #{tpu_custom_call.1} parent=1 // pred_region
      %78 = dma.done [#allocation6], 1024
    $region41: #{tpu_custom_call.1} parent=1 // pred_fallthru
      _
    // Predicated region
    $region42: #{tpu_custom_call.1} parent=1 // pred_check
      _
    $region43: #{tpu_custom_call.1} parent=1 // pred_check_branch
      %80 = sbr.rel (0) target = $region45
    $region44: #{tpu_custom_call.1} parent=1 // pred_region
      %81 = dma.done [#allocation9], 1024
    $region45: #{tpu_custom_call.1} parent=1 // pred_fallthru
      _
    %v83 = vld [vmem:[#allocation2] sm:$0xff]
    %v84 = vld [vmem:[#allocation2 + $0x8] sm:$0xff]
    %v85 = vpack.c.bf16 %v84, %v83
    %v86 = vld [vmem:[#allocation5] sm:$0xf]
    %v87 = vld [vmem:[#allocation5 + $0x4] sm:$0xf]
    %v88 = vld [vmem:[#allocation5 + $0x8] sm:$0xf]
    %v89 = vld [vmem:[#allocation5 + $0xc] sm:$0xf]
    %v90 = vld [vmem:[#allocation5 + $0x10] sm:$0xf]
    %v91 = vld [vmem:[#allocation5 + $0x14] sm:$0xf]
    %v92 = vld [vmem:[#allocation5 + $0x18] sm:$0xf]
    %v93 = vld [vmem:[#allocation5 + $0x1c] sm:$0xf]
    %v94 = vld [vmem:[%s2] sm:$0x7]
    %v95 = vlaneseq
    %v96 = vshrl.u32 %v95, 7
    %v97 = vsub.s32 0, %v96
    %v98 = vrot.slane %v94, %v97
    %v107 = vunpack.c.l.b16 %v86
    %v108 = vunpack.c.l.b16 %v87
    %v109 = vunpack.c.l.b16 %v88
    %v110 = vunpack.c.l.b16 %v89
    %v111 = vunpack.c.l.b16 %v90
    %v112 = vunpack.c.l.b16 %v91
    %v113 = vunpack.c.l.b16 %v92
    %v114 = vunpack.c.l.b16 %v93
    %v115 = vpack.c.b16 %v108, %v107
    %v116 = vpack.c.b16 %v110, %v109
    %v117 = vpack.c.b16 %v112, %v111
    %v118 = vpack.c.b16 %v114, %v113
    %vm123 = vcmask 523264
    %v125 = vsel %vm123, %v85, 0
    %127 = vmatprep.subr.bf16.mxu0 0
    %128 = vmatpush1.bf16.msra.mxu0 %v115
    %129 = vmatprep.subr.bf16.mxu0 0
    %130 = vmatpush1.bf16.msra.mxu0 %v116
    %131 = vmatprep.subr.bf16.mxu0 0
    %132 = vmatpush1.bf16.msra.mxu0 %v117
    %133 = vmatprep.subr.bf16.mxu0 0
    %134 = vmatpush1.bf16.msra.mxu0 %v118
    %135 = vmatprep.subr.bf16.mxu0 0
    %136 = vmatpush1.bf16.msra.mxu0 0
    %137 = vmatprep.subr.bf16.mxu0 0
    %138 = vmatpush1.bf16.msra.mxu0 0
    %139 = vmatprep.subr.bf16.mxu0 0
    %140 = vmatpush1.bf16.msra.mxu0 0
    %141 = vmatprep.subr.bf16.mxu0 0
    %142 = vmatpush1.bf16.msra.mxu0 0
    %143 = vmatprep.subr.bf16.mxu0 0
    %144 = vmatpush1.bf16.msra.mxu0 0
    %145 = vmatprep.subr.bf16.mxu0 0
    %146 = vmatpush1.bf16.msra.mxu0 0
    %147 = vmatprep.subr.bf16.mxu0 0
    %148 = vmatpush1.bf16.msra.mxu0 0
    %149 = vmatprep.subr.bf16.mxu0 0
    %150 = vmatpush1.bf16.msra.mxu0 0
    %151 = vmatprep.subr.bf16.mxu0 0
    %152 = vmatpush1.bf16.msra.mxu0 0
    %153 = vmatprep.subr.bf16.mxu0 0
    %154 = vmatpush1.bf16.msra.mxu0 0
    %155 = vmatprep.subr.bf16.mxu0 0
    %156 = vmatpush1.bf16.msra.mxu0 0
    %157 = vmatprep.subr.bf16.mxu0 0
    %158 = vmatpush1.bf16.msra.mxu0 0
    %159 = vmatprep.mubr.bf16.mxu0 0
    %160 = vmatmul.mubr.bf16.gmra.mrb[0].mxu0 %v125
    %v161 = vpop.f32.mrb[0].mxu0
    %v162 = vadd.f32 %v98, %v161
    %v163 = vpop.f32.mrb[0].mxu0
    %v164 = vpop.f32.mrb[0].mxu0
    %v165 = vadd.f32 %v98, %v164
    %v166 = vpop.f32.mrb[0].mxu0
    %167 = vdwg.mxu0
    %v168 = vmax.f32 %v162, 0.0
    %v169 = vmax.f32 %v165, 0.0
    %v170 = vadd.f32 %v168, %v169
    %v171 = vrot.slane %v170, 4
    %v172 = vadd.f32 %v170, %v171
    %v173 = vrot.slane %v172, 2
    %v174 = vadd.f32 %v172, %v173
    %v175 = vrot.slane %v174, 1
    %v176 = vadd.f32 %v174, %v175
    %v177 = vrcp.pop 16.0
    %v178 = vmul.f32 %v176, %v177
    %v179 = vsub.f32 %v168, %v178
    %v180 = vsub.f32 %v169, %v178
    %v181 = vmul.f32 %v179, %v179
    %v182 = vmul.f32 %v180, %v180
    %v183 = vadd.f32 %v181, %v182
    %v184 = vrot.slane %v183, 4
    %v185 = vadd.f32 %v183, %v184
    %v186 = vrot.slane %v185, 2
    %v187 = vadd.f32 %v185, %v186
    %v188 = vrot.slane %v187, 1
    %v189 = vadd.f32 %v187, %v188
    %v190 = vmul.f32 %v189, %v177
    %v191 = vadd.f32 %v190, 1e-05
    %v192 = vrsqrt.pop %v191
    %v193 = vmul.f32 %v94, %v192
    %v194 = vmul.f32 %v178, %v193
    %v196 = vrot.slane %v194, 7
    %v198 = vsub.f32 %v94, %v196
    %v199 = vlaneseq
    %v200 = vshrl.u32 %v199, 7
    %v201 = vsub.s32 1, %v200
    %v202 = vrot.slane %v193, %v201
    %v203 = vmul.f32 %v168, %v202
    %v204 = vmul.f32 %v169, %v202
    %v205 = vlaneseq
    %v206 = vshrl.u32 %v205, 7
    %v207 = vsub.s32 2, %v206
    %v208 = vrot.slane %v198, %v207
    %v209 = vadd.f32 %v203, %v208
    %v210 = vadd.f32 %v204, %v208
    %v211 = vpack.c.bf16 %v210, %v209
    %v212 = vld [vmem:[#allocation7] sm:$0xf]
    %v213 = vld [vmem:[#allocation7 + $0x4] sm:$0xf]
    %v214 = vld [vmem:[#allocation7 + $0x8] sm:$0xf]
    %v215 = vld [vmem:[#allocation7 + $0xc] sm:$0xf]
    %v216 = vld [vmem:[#allocation7 + $0x10] sm:$0xf]
    %v217 = vld [vmem:[#allocation7 + $0x14] sm:$0xf]
    %v218 = vld [vmem:[#allocation7 + $0x18] sm:$0xf]
    %v219 = vld [vmem:[#allocation7 + $0x1c] sm:$0xf]
    %v220 = vld [vmem:[#allocation7 + $0x20] sm:$0xf]
    %v221 = vld [vmem:[#allocation7 + $0x24] sm:$0xf]
    %v222 = vld [vmem:[#allocation7 + $0x28] sm:$0xf]
    %v223 = vld [vmem:[#allocation7 + $0x2c] sm:$0xf]
    %v224 = vld [vmem:[#allocation7 + $0x30] sm:$0xf]
    %v225 = vld [vmem:[#allocation7 + $0x34] sm:$0xf]
    %v226 = vld [vmem:[#allocation7 + $0x38] sm:$0xf]
    %v227 = vld [vmem:[#allocation7 + $0x3c] sm:$0xf]
    %v228 = vld [vmem:[%s4] sm:$0x7]
    %v229 = vlaneseq
    %v230 = vshrl.u32 %v229, 7
    %v231 = vsub.s32 0, %v230
    %v232 = vrot.slane %v228, %v231
    %v249 = vunpack.c.l.b16 %v212
    %v250 = vunpack.c.l.b16 %v213
    %v251 = vunpack.c.l.b16 %v214
    %v252 = vunpack.c.l.b16 %v215
    %v253 = vunpack.c.l.b16 %v216
    %v254 = vunpack.c.l.b16 %v217
    %v255 = vunpack.c.l.b16 %v218
    %v256 = vunpack.c.l.b16 %v219
    %v257 = vunpack.c.l.b16 %v220
    %v258 = vunpack.c.l.b16 %v221
    %v259 = vunpack.c.l.b16 %v222
    %v260 = vunpack.c.l.b16 %v223
    %v261 = vunpack.c.l.b16 %v224
    %v262 = vunpack.c.l.b16 %v225
    %v263 = vunpack.c.l.b16 %v226
    %v264 = vunpack.c.l.b16 %v227
    %v265 = vpack.c.b16 %v250, %v249
    %v266 = vpack.c.b16 %v252, %v251
    %v267 = vpack.c.b16 %v254, %v253
    %v268 = vpack.c.b16 %v256, %v255
    %v269 = vpack.c.b16 %v258, %v257
    %v270 = vpack.c.b16 %v260, %v259
    %v271 = vpack.c.b16 %v262, %v261
    %v272 = vpack.c.b16 %v264, %v263
    %281 = vmatprep.subr.bf16.mxu0 0
    %282 = vmatpush1.bf16.msra.mxu0 %v265
    %283 = vmatprep.subr.bf16.mxu0 0
    %284 = vmatpush1.bf16.msra.mxu0 %v266
    %285 = vmatprep.subr.bf16.mxu0 0
    %286 = vmatpush1.bf16.msra.mxu0 %v267
    %287 = vmatprep.subr.bf16.mxu0 0
    %288 = vmatpush1.bf16.msra.mxu0 %v268
    %289 = vmatprep.subr.bf16.mxu0 0
    %290 = vmatpush1.bf16.msra.mxu0 %v269
    %291 = vmatprep.subr.bf16.mxu0 0
    %292 = vmatpush1.bf16.msra.mxu0 %v270
    %293 = vmatprep.subr.bf16.mxu0 0
    %294 = vmatpush1.bf16.msra.mxu0 %v271
    %295 = vmatprep.subr.bf16.mxu0 0
    %296 = vmatpush1.bf16.msra.mxu0 %v272
    %297 = vmatprep.subr.bf16.mxu0 0
    %298 = vmatpush1.bf16.msra.mxu0 0
    %299 = vmatprep.subr.bf16.mxu0 0
    %300 = vmatpush1.bf16.msra.mxu0 0
    %301 = vmatprep.subr.bf16.mxu0 0
    %302 = vmatpush1.bf16.msra.mxu0 0
    %303 = vmatprep.subr.bf16.mxu0 0
    %304 = vmatpush1.bf16.msra.mxu0 0
    %305 = vmatprep.subr.bf16.mxu0 0
    %306 = vmatpush1.bf16.msra.mxu0 0
    %307 = vmatprep.subr.bf16.mxu0 0
    %308 = vmatpush1.bf16.msra.mxu0 0
    %309 = vmatprep.subr.bf16.mxu0 0
    %310 = vmatpush1.bf16.msra.mxu0 0
    %311 = vmatprep.subr.bf16.mxu0 0
    %312 = vmatpush1.bf16.msra.mxu0 0
    %313 = vmatprep.mubr.bf16.mxu0 0
    %314 = vmatmul.mubr.bf16.gmra.mrb[0].mxu0 %v211
    %v315 = vpop.f32.mrb[0].mxu0
    %v316 = vadd.f32 %v232, %v315
    %v317 = vpop.f32.mrb[0].mxu0
    %v318 = vpop.f32.mrb[0].mxu0
    %v319 = vadd.f32 %v232, %v318
    %v320 = vpop.f32.mrb[0].mxu0
    %321 = vdwg.mxu0
    %v322 = vmax.f32 %v316, 0.0
    %v323 = vmax.f32 %v319, 0.0
    %v324 = vadd.f32 %v322, %v323
    %v325 = vrot.slane %v324, 4
    %v326 = vadd.f32 %v324, %v325
    %v327 = vrot.slane %v326, 2
    %v328 = vadd.f32 %v326, %v327
    %v329 = vrot.slane %v328, 1
    %v330 = vadd.f32 %v328, %v329
    %v331 = vmul.f32 %v330, %v177
    %v332 = vsub.f32 %v322, %v331
    %v333 = vsub.f32 %v323, %v331
    %v334 = vmul.f32 %v332, %v332
    %v335 = vmul.f32 %v333, %v333
    %v336 = vadd.f32 %v334, %v335
    %v337 = vrot.slane %v336, 4
    %v338 = vadd.f32 %v336, %v337
    %v339 = vrot.slane %v338, 2
    %v340 = vadd.f32 %v338, %v339
    %v341 = vrot.slane %v340, 1
    %v342 = vadd.f32 %v340, %v341
    %v343 = vmul.f32 %v342, %v177
    %v344 = vadd.f32 %v343, 1e-05
    %v345 = vrsqrt.pop %v344
    %v346 = vmul.f32 %v228, %v345
    %v347 = vmul.f32 %v331, %v346
    %v349 = vrot.slane %v347, 7
    %v351 = vsub.f32 %v228, %v349
    %v352 = vlaneseq
    %v353 = vshrl.u32 %v352, 7
    %v354 = vsub.s32 1, %v353
    %v355 = vrot.slane %v346, %v354
    %v356 = vmul.f32 %v322, %v355
    %v357 = vmul.f32 %v323, %v355
    %v358 = vlaneseq
    %v359 = vshrl.u32 %v358, 7
    %v360 = vsub.s32 2, %v359
    %v361 = vrot.slane %v351, %v360
    %v362 = vadd.f32 %v356, %v361
    %v363 = vadd.f32 %v357, %v361
    %v364 = vpack.c.bf16 %v363, %v362
    %v365 = vld [vmem:[#allocation8] sm:$0xf]
    %v366 = vld [vmem:[#allocation8 + $0x4] sm:$0xf]
    %v367 = vld [vmem:[#allocation8 + $0x8] sm:$0xf]
    %v368 = vld [vmem:[#allocation8 + $0xc] sm:$0xf]
    %v369 = vld [vmem:[#allocation8 + $0x10] sm:$0xf]
    %v370 = vld [vmem:[#allocation8 + $0x14] sm:$0xf]
    %v371 = vld [vmem:[#allocation8 + $0x18] sm:$0xf]
    %v372 = vld [vmem:[#allocation8 + $0x1c] sm:$0xf]
    %v373 = vld [vmem:[#allocation8 + $0x20] sm:$0xf]
    %v374 = vld [vmem:[#allocation8 + $0x24] sm:$0xf]
    %v375 = vld [vmem:[#allocation8 + $0x28] sm:$0xf]
    %v376 = vld [vmem:[#allocation8 + $0x2c] sm:$0xf]
    %v377 = vld [vmem:[#allocation8 + $0x30] sm:$0xf]
    %v378 = vld [vmem:[#allocation8 + $0x34] sm:$0xf]
    %v379 = vld [vmem:[#allocation8 + $0x38] sm:$0xf]
    %v380 = vld [vmem:[#allocation8 + $0x3c] sm:$0xf]
    %v381 = vld [vmem:[%s6] sm:$0x7]
    %v382 = vlaneseq
    %v383 = vshrl.u32 %v382, 7
    %v384 = vsub.s32 0, %v383
    %v385 = vrot.slane %v381, %v384
    %v402 = vunpack.c.l.b16 %v365
    %v403 = vunpack.c.l.b16 %v366
    %v404 = vunpack.c.l.b16 %v367
    %v405 = vunpack.c.l.b16 %v368
    %v406 = vunpack.c.l.b16 %v369
    %v407 = vunpack.c.l.b16 %v370
    %v408 = vunpack.c.l.b16 %v371
    %v409 = vunpack.c.l.b16 %v372
    %v410 = vunpack.c.l.b16 %v373
    %v411 = vunpack.c.l.b16 %v374
    %v412 = vunpack.c.l.b16 %v375
    %v413 = vunpack.c.l.b16 %v376
    %v414 = vunpack.c.l.b16 %v377
    %v415 = vunpack.c.l.b16 %v378
    %v416 = vunpack.c.l.b16 %v379
    %v417 = vunpack.c.l.b16 %v380
    %v418 = vpack.c.b16 %v403, %v402
    %v419 = vpack.c.b16 %v405, %v404
    %v420 = vpack.c.b16 %v407, %v406
    %v421 = vpack.c.b16 %v409, %v408
    %v422 = vpack.c.b16 %v411, %v410
    %v423 = vpack.c.b16 %v413, %v412
    %v424 = vpack.c.b16 %v415, %v414
    %v425 = vpack.c.b16 %v417, %v416
    %434 = vmatprep.subr.bf16.mxu0 0
    %435 = vmatpush1.bf16.msra.mxu0 %v418
    %436 = vmatprep.subr.bf16.mxu0 0
    %437 = vmatpush1.bf16.msra.mxu0 %v419
    %438 = vmatprep.subr.bf16.mxu0 0
    %439 = vmatpush1.bf16.msra.mxu0 %v420
    %440 = vmatprep.subr.bf16.mxu0 0
    %441 = vmatpush1.bf16.msra.mxu0 %v421
    %442 = vmatprep.subr.bf16.mxu0 0
    %443 = vmatpush1.bf16.msra.mxu0 %v422
    %444 = vmatprep.subr.bf16.mxu0 0
    %445 = vmatpush1.bf16.msra.mxu0 %v423
    %446 = vmatprep.subr.bf16.mxu0 0
    %447 = vmatpush1.bf16.msra.mxu0 %v424
    %448 = vmatprep.subr.bf16.mxu0 0
    %449 = vmatpush1.bf16.msra.mxu0 %v425
    %450 = vmatprep.subr.bf16.mxu0 0
    %451 = vmatpush1.bf16.msra.mxu0 0
    %452 = vmatprep.subr.bf16.mxu0 0
    %453 = vmatpush1.bf16.msra.mxu0 0
    %454 = vmatprep.subr.bf16.mxu0 0
    %455 = vmatpush1.bf16.msra.mxu0 0
    %456 = vmatprep.subr.bf16.mxu0 0
    %457 = vmatpush1.bf16.msra.mxu0 0
    %458 = vmatprep.subr.bf16.mxu0 0
    %459 = vmatpush1.bf16.msra.mxu0 0
    %460 = vmatprep.subr.bf16.mxu0 0
    %461 = vmatpush1.bf16.msra.mxu0 0
    %462 = vmatprep.subr.bf16.mxu0 0
    %463 = vmatpush1.bf16.msra.mxu0 0
    %464 = vmatprep.subr.bf16.mxu0 0
    %465 = vmatpush1.bf16.msra.mxu0 0
    %466 = vmatprep.mubr.bf16.mxu0 0
    %467 = vmatmul.mubr.bf16.gmra.mrb[0].mxu0 %v364
    %v468 = vpop.f32.mrb[0].mxu0
    %v469 = vadd.f32 %v385, %v468
    %v470 = vpop.f32.mrb[0].mxu0
    %v471 = vpop.f32.mrb[0].mxu0
    %v472 = vadd.f32 %v385, %v471
    %v473 = vpop.f32.mrb[0].mxu0
    %474 = vdwg.mxu0
    %v475 = vmax.f32 %v469, 0.0
    %v476 = vmax.f32 %v472, 0.0
    %v477 = vadd.f32 %v475, %v476
    %v478 = vrot.slane %v477, 4
    %v479 = vadd.f32 %v477, %v478
    %v480 = vrot.slane %v479, 2
    %v481 = vadd.f32 %v479, %v480
    %v482 = vrot.slane %v481, 1
    %v483 = vadd.f32 %v481, %v482
    %v484 = vmul.f32 %v483, %v177
    %v485 = vsub.f32 %v475, %v484
    %v486 = vsub.f32 %v476, %v484
    %v487 = vmul.f32 %v485, %v485
    %v488 = vmul.f32 %v486, %v486
    %v489 = vadd.f32 %v487, %v488
    %v490 = vrot.slane %v489, 4
    %v491 = vadd.f32 %v489, %v490
    %v492 = vrot.slane %v491, 2
    %v493 = vadd.f32 %v491, %v492
    %v494 = vrot.slane %v493, 1
    %v495 = vadd.f32 %v493, %v494
    %v496 = vmul.f32 %v495, %v177
    %v497 = vadd.f32 %v496, 1e-05
    %v498 = vrsqrt.pop %v497
    %v499 = vmul.f32 %v381, %v498
    %v500 = vmul.f32 %v484, %v499
    %v502 = vrot.slane %v500, 7
    %v504 = vsub.f32 %v381, %v502
    %v505 = vlaneseq
    %v506 = vshrl.u32 %v505, 7
    %v507 = vsub.s32 1, %v506
    %v508 = vrot.slane %v499, %v507
    %v509 = vmul.f32 %v475, %v508
    %v510 = vmul.f32 %v476, %v508
    %v511 = vlaneseq
    %v512 = vshrl.u32 %v511, 7
    %v513 = vsub.s32 2, %v512
    %v514 = vrot.slane %v504, %v513
    %v515 = vadd.f32 %v509, %v514
    %v516 = vadd.f32 %v510, %v514
    %517 = vst [vmem:[#allocation10] sm:$0xff] %v515
    %518 = vst [vmem:[#allocation10 + $0x8] sm:$0xff] %v516
    // Predicated region
    $region46: #{tpu_custom_call.1} parent=1 // pred_check
      _
    $region47: #{tpu_custom_call.1} parent=1 // pred_check_branch
      %520 = sbr.rel (0) target = $region49
    $region48: #{tpu_custom_call.1} parent=1 // pred_region
      %s522 = ssub.s32 256, 256
      %523 = vsyncadd [#allocation4], %s522
      %s524 = sshll.u32 [#allocation10], 4
      %s525 = int_to_ptr.vmem [resolvable:$true] %s524
      %530 = dma.vmem_to_hbm [thread:$0]  %s525, 256, %s7, [#allocation4], 128, 128, 8
    $region49: #{tpu_custom_call.1} parent=1 // pred_fallthru
      _
    // Predicated region
    $region50: #{tpu_custom_call.1} parent=1 // pred_check
      _
    $region51: #{tpu_custom_call.1} parent=1 // pred_check_branch
      %532 = sbr.rel (0) target = $region53
    $region52: #{tpu_custom_call.1} parent=1 // pred_region
      %533 = dma.done [#allocation4], 256
    $region53: #{tpu_custom_call.1} parent=1 // pred_fallthru
      _
    %534 = vsyncpa [#allocation3], 1
    %535 = vsyncpa [#allocation6], 1
    %536 = vsyncpa [#allocation9], 1
    %537 = vsyncpa [#allocation4], 1

</llo_original>
